<compile_context>
chip_gen: v7x
topology: tpu7x:2x2x1
jax: 0.10.0
libtpu: 0.0.40
codegen_flags: <defaults>
</compile_context>

<pallas_src>
import functools

import jax
import jax.numpy as jnp
from jax.experimental import pallas as pl
from jax.experimental.pallas import tpu as pltpu


# ---------------------------------------------------------------------------
# Kernels
# ---------------------------------------------------------------------------

def _blinear_kernel_1k(x_ref, w_ref, b_ref, o_ref, *, acc_dtype):
    """K axis fully collapsed: single MXU dot per (i, j) tile, direct store."""
    acc = jnp.dot(x_ref[...], w_ref[...], preferred_element_type=acc_dtype)
    o_ref[...] = (acc.astype(jnp.float32) + b_ref[...]).astype(o_ref.dtype)


def _blinear_kernel_kacc(x_ref, w_ref, b_ref, o_ref, acc_ref):
    """K-tiled reduction: VMEM accumulator, init on k==0, finalize on k==last."""
    k = pl.program_id(2)

    @pl.when(k == 0)
    def _init():
        acc_ref[...] = jnp.zeros_like(acc_ref)

    acc_ref[...] += jnp.dot(
        x_ref[...], w_ref[...], preferred_element_type=acc_ref.dtype
    )

    @pl.when(k == pl.num_programs(2) - 1)
    def _finalize():
        acc = acc_ref[...].astype(jnp.float32)
        o_ref[...] = (acc + b_ref[...]).astype(o_ref.dtype)


# ---------------------------------------------------------------------------
# Helpers
# ---------------------------------------------------------------------------

def _round_up(x, m):
    return ((x + m - 1) // m) * m


def _pad2d(a, rows, cols):
    r, c = a.shape
    if r == rows and c == cols:
        return a
    return jnp.pad(a, ((0, rows - r), (0, cols - c)))


def _row_align(dtype):
    # native sublane packing: f32 -> 8, bf16 -> 16, int8/fp8 -> 32
    return {1: 32, 2: 16, 4: 8}[jnp.dtype(dtype).itemsize]


def _pick_tile(dim_p, pref):
    """Largest multiple of 128 that is <= pref and divides dim_p (dim_p % 128 == 0)."""
    t = min(pref, dim_p)
    t = max(128, (t // 128) * 128)
    while dim_p % t != 0:
        t -= 128
    return t


def _select_dtypes(binarize_input):
    """(x_dtype, w_dtype, acc_dtype) chosen per TPU generation."""
    try:
        kind = jax.devices()[0].device_kind.lower()
    except Exception:  # pragma: no cover - CPU/interpret fallback
        kind = ""
    if not binarize_input:
        # x stays f32 (numerically faithful); sign(W) is exactly +-1/0 -> bf16 lossless.
        return jnp.float32, jnp.bfloat16, jnp.float32
    if "v7" in kind:
        # v7x MXU has no integer mode; +-1/0 are exact in fp8 e4m3.
        return jnp.float8_e4m3fn, jnp.float8_e4m3fn, jnp.float32
    if ("v5" in kind) or ("v6" in kind):
        # native int8 MXU path; int32 accumulation is bit-exact for +-1/0 operands.
        return jnp.int8, jnp.int8, jnp.int32
    # unknown / older generation: bf16 is exact for +-1/0 and universally supported.
    return jnp.bfloat16, jnp.bfloat16, jnp.float32


def _vmem_bytes(tm, tn, tk, x_dtype, w_dtype, acc_dtype, has_acc):
    xb = jnp.dtype(x_dtype).itemsize
    wb = jnp.dtype(w_dtype).itemsize
    est = (2 * tm * tk * xb          # x tiles (double buffered)
           + 2 * tk * tn * wb        # weight tiles
           + 2 * tn * 4              # bias tiles
           + 2 * tm * tn * 4)        # output tiles
    if has_acc:
        est += tm * tn * jnp.dtype(acc_dtype).itemsize
    return est


# ---------------------------------------------------------------------------
# Weight preparation (do once, reuse across forward calls)
# ---------------------------------------------------------------------------

def prepare_blinear(weight, bias, *, binarize_input=False):
    """Binarize + transpose + narrow-cast + pad the weight ONCE.

    weight: [out_features, in_features] float32
    bias:   [out_features] float32 (or None)
    """
    out_f, in_f = weight.shape
    if bias is None:
        bias = jnp.zeros((out_f,), dtype=jnp.float32)

    x_dtype, w_dtype, acc_dtype = _select_dtypes(binarize_input)

    out_f_p = _round_up(out_f, 128)
    in_f_p = _round_up(in_f, 128)

    # sign(W).T in the narrow streaming dtype (+-1/0 are exact in all of them).
    w_bin_t = jnp.sign(weight).T.astype(w_dtype)          # [in_f, out_f]
    w_p = _pad2d(w_bin_t, in_f_p, out_f_p)                 # pad contributes zeros
    b_p = _pad2d(bias.reshape(1, out_f).astype(jnp.float32), 1, out_f_p)

    return dict(w=w_p, b=b_p, out_f=out_f, in_f=in_f,
                x_dtype=x_dtype, acc_dtype=acc_dtype,
                binarize_input=binarize_input)


# ---------------------------------------------------------------------------
# Forward
# ---------------------------------------------------------------------------

def blinear_apply(x, prep, *, tm=None, tn=None, tk=None):
    """Run the BLinear forward with a prepared (cached) weight."""
    batch, in_f = x.shape
    assert in_f == prep["in_f"]

    x_dtype = prep["x_dtype"]
    acc_dtype = prep["acc_dtype"]
    w_p = prep["w"]
    b_p = prep["b"]
    kp, np_ = w_p.shape

    # ---- input prep (cheap: x is the small operand) ----
    if prep["binarize_input"]:
        x_in = jnp.sign(x).astype(x_dtype)
    else:
        x_in = x.astype(x_dtype)            # f32 -> f32, faithful numerics

    # ---- tile plan ----
    align = max(_row_align(x_dtype), 8)
    if tm is None:
        tm = min(256, _round_up(batch, align))
    else:
        tm = _round_up(min(tm, _round_up(batch, align)), align)
    mp = _round_up(batch, tm)

    tn = _pick_tile(np_, tn if tn is not None else 512)

    if tk is not None:
        tk = _pick_tile(kp, tk)
    else:
        # Collapse the K grid axis entirely when the whole-K tiles fit VMEM.
        est_full_k = _vmem_bytes(max(tm, 256), tn, kp, x_dtype, w_p.dtype,
                                 acc_dtype, has_acc=False)
        tk = kp if est_full_k <= 20 * 1024 * 1024 else _pick_tile(kp, 1024)

    # Megacore: make sure the parallel grid has >= 2 blocks when batch grid is 1.
    if (mp // tm) == 1 and (np_ // tn) == 1 and np_ >= 256:
        tn = _pick_tile(np_, np_ // 2)

    n_k = kp // tk
    x_p = _pad2d(x_in, mp, kp)

    out_dtype = x.dtype if jnp.issubdtype(x.dtype, jnp.floating) else jnp.float32

    # ---- scheduling hints ----
    est = _vmem_bytes(tm, tn, tk, x_dtype, w_p.dtype, acc_dtype, has_acc=(n_k > 1))
    vmem_limit = int(min(max(2 * est, 32 * 1024 * 1024), 56 * 1024 * 1024))
    cost = pl.CostEstimate(
        flops=2 * mp * np_ * kp,
        transcendentals=0,
        bytes_accessed=(x_p.size * x_p.dtype.itemsize
                        + w_p.size * w_p.dtype.itemsize
                        + b_p.size * 4
                        + mp * np_ * jnp.dtype(out_dtype).itemsize),
    )

    # ---- launch ----
    if n_k == 1:
        kernel = functools.partial(_blinear_kernel_1k, acc_dtype=acc_dtype)
        grid = (mp // tm, np_ // tn)
        in_specs = [
            pl.BlockSpec((tm, kp), lambda i, j: (i, 0)),   # x (whole K)
            pl.BlockSpec((kp, tn), lambda i, j: (0, j)),   # sign(W).T (whole K)
            pl.BlockSpec((1, tn), lambda i, j: (0, j)),    # bias
        ]
        out_spec = pl.BlockSpec((tm, tn), lambda i, j: (i, j))
        scratch = []
        dims = ("parallel", "parallel")
    else:
        kernel = _blinear_kernel_kacc
        grid = (mp // tm, np_ // tn, n_k)
        in_specs = [
            pl.BlockSpec((tm, tk), lambda i, j, k: (i, k)),
            pl.BlockSpec((tk, tn), lambda i, j, k: (k, j)),
            pl.BlockSpec((1, tn), lambda i, j, k: (0, j)),
        ]
        out_spec = pl.BlockSpec((tm, tn), lambda i, j, k: (i, j))
        scratch = [pltpu.VMEM((tm, tn), acc_dtype)]
        dims = ("parallel", "parallel", "arbitrary")

    out_p = pl.pallas_call(
        kernel,
        out_shape=jax.ShapeDtypeStruct((mp, np_), out_dtype),
        grid=grid,
        in_specs=in_specs,
        out_specs=out_spec,
        scratch_shapes=scratch,
        compiler_params=pltpu.CompilerParams(
            dimension_semantics=dims,
            vmem_limit_bytes=vmem_limit,
        ),
        cost_estimate=cost,
    )(x_p, w_p, b_p)

    return out_p[:batch, :prep["out_f"]]


def blinear_forward(x, weight, bias, *, binarize_input=False,
                    tm=None, tn=None, tk=None):
    """Convenience one-shot forward (prepares the weight each call).
    For inference, call prepare_blinear once and reuse with blinear_apply."""
    prep = prepare_blinear(weight, bias, binarize_input=binarize_input)
    return blinear_apply(x, prep, tm=tm, tn=tn, tk=tk)


def init_blinear_params(key, in_features, out_features):
    """Deterministic init matching the PyTorch module:
    xavier_normal_ on weight, zeros on bias."""
    std = (2.0 / (in_features + out_features)) ** 0.5
    w = std * jax.random.normal(key, (out_features, in_features), dtype=jnp.float32)
    b = jnp.zeros((out_features,), dtype=jnp.float32)
    return w, b


if __name__ == "__main__":
    root = jax.random.PRNGKey(0)
    k_x1, k_w1, k_x2, k_w2, k_x3, k_w3 = jax.random.split(root, 6)

    # Case 1: small module-consistent shapes (batch=8, in=32, out=16),
    # binarize_input=False. f32 activations x bf16(+-1) weights, collapsed K.
    x1 = jax.random.normal(k_x1, (8, 32), dtype=jnp.float32)
    w1, b1 = init_blinear_params(k_w1, 32, 16)
    out1 = jax.block_until_ready(blinear_forward(x1, w1, b1, binarize_input=False))
    ref1 = x1 @ jnp.sign(w1).T + b1[None, :]
    assert out1.shape == (8, 16)
    assert jnp.allclose(out1, ref1, atol=1e-4, rtol=1e-4), "case1 mismatch"

    # Case 2: binarize_input=True with a cached prepared weight (inference style);
    # exercises the narrow-dtype (int8 / fp8 / bf16) path and collapsed K axis.
    x2 = jax.random.normal(k_x2, (16, 384), dtype=jnp.float32)
    w2, b2 = init_blinear_params(k_w2, 384, 256)
    prep2 = prepare_blinear(w2, b2, binarize_input=True)
    out2 = jax.block_until_ready(blinear_apply(x2, prep2))
    out2b = jax.block_until_ready(blinear_apply(x2, prep2))  # reuse cached weight
    ref2 = jnp.sign(x2) @ jnp.sign(w2).T + b2[None, :]
    assert out2.shape == (16, 256)
    assert jnp.allclose(out2, ref2, atol=1e-3, rtol=1e-3), "case2 mismatch"
    assert jnp.allclose(out2b, ref2, atol=1e-3, rtol=1e-3), "case2(reuse) mismatch"

    # Case 3: force a tiled K axis (tk=128 -> 2 reduction steps) to exercise the
    # accumulator kernel with pl.when init/finalize and the narrow-dtype dot.
    x3 = jax.random.normal(k_x3, (8, 256), dtype=jnp.float32)
    w3, b3 = init_blinear_params(k_w3, 256, 256)
    out3 = jax.block_until_ready(
        blinear_forward(x3, w3, b3, binarize_input=True, tk=128))
    ref3 = jnp.sign(x3) @ jnp.sign(w3).T + b3[None, :]
    assert out3.shape == (8, 256)
    assert jnp.allclose(out3, ref3, atol=1e-3, rtol=1e-3), "case3 mismatch"

    print("KERNEL_OK")
</pallas_src>

<mosaic_0001>
module attributes {stable_mosaic.version = 11 : i64} {
  func.func @_blinear_kernel_1k(%arg0: i32, %arg1: i32, %arg2: memref<8x128xf32, #tpu.memory_space<vmem>>, %arg3: memref<128x128xbf16, #tpu.memory_space<vmem>>, %arg4: memref<1x128xf32, #tpu.memory_space<vmem>>, %arg5: memref<8x128xf32, #tpu.memory_space<vmem>>) attributes {dimension_semantics = [#tpu.dimension_semantics<parallel>, #tpu.dimension_semantics<parallel>], iteration_bounds = array<i64: 1, 1>, scalar_prefetch = 0 : i64, scratch_operands = 0 : i64, tpu.core_type = #tpu.core_type<tc>, window_params = [{transform_indices = @transform_0, window_bounds = array<i64: 8, 128>}, {transform_indices = @transform_1, window_bounds = array<i64: 128, 128>}, {transform_indices = @transform_2, window_bounds = array<i64: 1, 128>}, {transform_indices = @transform_3, window_bounds = array<i64: 8, 128>}]} {
    %c0 = arith.constant 0 : index
    %c0_0 = arith.constant 0 : index
    %0 = vector.load %arg2[%c0, %c0_0] : memref<8x128xf32, #tpu.memory_space<vmem>>, vector<8x128xf32>
    %c0_1 = arith.constant 0 : index
    %c0_2 = arith.constant 0 : index
    %1 = vector.load %arg3[%c0_1, %c0_2] : memref<128x128xbf16, #tpu.memory_space<vmem>>, vector<128x128xbf16>
    %cst = arith.constant dense<0.000000e+00> : vector<8x128xf32>
    %2 = tpu.matmul %0, %1, %cst {dimension_numbers = #tpu.dot_dimension_numbers<[1], [0], [0], [1], [0, 0, 1, 1], [], []>} : vector<8x128xf32>, vector<128x128xbf16>, vector<8x128xf32> -> vector<8x128xf32>
    %c0_3 = arith.constant 0 : index
    %c0_4 = arith.constant 0 : index
    %3 = vector.load %arg4[%c0_3, %c0_4] : memref<1x128xf32, #tpu.memory_space<vmem>>, vector<1x128xf32>
    %4 = vector.broadcast %3 : vector<1x128xf32> to vector<8x128xf32>
    %5 = arith.addf %2, %4 : vector<8x128xf32>
    %c0_5 = arith.constant 0 : index
    %c0_6 = arith.constant 0 : index
    %6 = vector.load %arg5[%c0_5, %c0_6] : memref<8x128xf32, #tpu.memory_space<vmem>>, vector<8x128xf32>
    tpu.vector_store %arg5[%c0_5, %c0_6], %5 {strides = array<i32>} : memref<8x128xf32, #tpu.memory_space<vmem>>, vector<8x128xf32>,
    return
  }
  func.func @transform_0(%arg0: i32, %arg1: i32) -> (i32, i32) {
    %c0_i32 = arith.constant 0 : i32
    %c0_i32_0 = arith.constant 0 : i32
    return %arg0, %c0_i32 : i32, i32
  }
  func.func @transform_1(%arg0: i32, %arg1: i32) -> (i32, i32) {
    %c0_i32 = arith.constant 0 : i32
    %c0_i32_0 = arith.constant 0 : i32
    return %c0_i32, %arg1 : i32, i32
  }
  func.func @transform_2(%arg0: i32, %arg1: i32) -> (i32, i32) {
    %c0_i32 = arith.constant 0 : i32
    %c0_i32_0 = arith.constant 0 : i32
    return %c0_i32, %arg1 : i32, i32
  }
  func.func @transform_3(%arg0: i32, %arg1: i32) -> (i32, i32) {
    %c0_i32 = arith.constant 0 : i32
    return %arg0, %arg1 : i32, i32
  }
}

</mosaic_0001>

<llo_original>
// kernel: tpu_custom_call.1
$region0: #{tpu_custom_call.1}
  #allocation0 [shape = 'u32[]', space=smem, size = 0x4, offset = 0x4, fixed_abs, tag = 'smem constant byte address 0x4 - core index']
  #allocation1 [shape = 'u32[144,128]{1,0:T(1,128)}', space=vmem, size = 0x12000, scoped, tag = 'internal scratch']
  %s0 = inlined_call_operand.hbm [shape: f32[8,128], index: 0, kind: input, shape index: {}]
  %s1 = inlined_call_operand.hbm [shape: bf16[128,128], index: 1, kind: input, shape index: {}]
  %s2 = inlined_call_operand.vmem [shape: f32[1,128], index: 2, kind: input, shape index: {}]
  %s3 = inlined_call_operand.hbm [shape: f32[8,128], index: 3, kind: output, shape index: {}]
  %s4 = sld [smem:[#allocation0]]
  $region30: #{tpu_custom_call.1} parent=0
    _
  %s6 = ssub.s32 1, %s4
  %s7 = scalar_select 0, %s6, %s4
  $region1: #{tpu_custom_call.1} parent=0
    #allocation2 [shape = 'u8[4096]{0}', space=vmem, size = 0x1000, scoped, tag = 'input window, operand 0, single buffered']
    #allocation3 [shape = 's32[1]{0}', space=sflag, size = 0x4, scoped, tag = 'scoped memory for tpu_custom_call.1']
    #allocation4 [shape = 's32[1]{0}', space=sflag, size = 0x4, scoped, tag = 'scoped memory for tpu_custom_call.1']
    #allocation5 [shape = 'u8[32768]{0}', space=vmem, size = 0x8000, scoped, tag = 'input window, operand 1, single buffered']
    #allocation6 [shape = 's32[1]{0}', space=sflag, size = 0x4, scoped, tag = 'scoped memory for tpu_custom_call.1']
    #allocation7 [shape = 'u8[4096]{0}', space=vmem, size = 0x1000, scoped, tag = 'output window, operand 0, single buffered']
    %8 = vsyncpa [#allocation3], 0
    %9 = vsyncpa [#allocation6], 0
    %10 = vsyncpa [#allocation4], 0
    // Predicated region
    $region2: #{tpu_custom_call.1} parent=1 // pred_check
      _
    $region3: #{tpu_custom_call.1} parent=1 // pred_check_branch
      %12 = sbr.rel (0) target = $region5
    $region4: #{tpu_custom_call.1} parent=1 // pred_region
      %s14 = ssub.s32 128, 128
      %15 = vsyncadd [#allocation3], %s14
      %s17 = sshll.u32 [#allocation2], 4
      %s18 = int_to_ptr.vmem [resolvable:$true] %s17
      %20 = dma.hbm_to_vmem [thread:$0]  %s0, 128, %s18, [#allocation3]
    $region5: #{tpu_custom_call.1} parent=1 // pred_fallthru
      _
    // Predicated region
    $region6: #{tpu_custom_call.1} parent=1 // pred_check
      _
    $region7: #{tpu_custom_call.1} parent=1 // pred_check_branch
      %22 = sbr.rel (0) target = $region9
    $region8: #{tpu_custom_call.1} parent=1 // pred_region
      %s24 = ssub.s32 1024, 1024
      %25 = vsyncadd [#allocation6], %s24
      %s26 = sshll.u32 [#allocation5], 4
      %s27 = int_to_ptr.vmem [resolvable:$true] %s26
      %32 = dma.hbm_to_vmem [thread:$0]  %s1, 1024, %s27, [#allocation6], 64, 64, 4
    $region9: #{tpu_custom_call.1} parent=1 // pred_fallthru
      _
    // Predicated region
    $region10: #{tpu_custom_call.1} parent=1 // pred_check
      _
    $region11: #{tpu_custom_call.1} parent=1 // pred_check_branch
      %34 = sbr.rel (0) target = $region13
    $region12: #{tpu_custom_call.1} parent=1 // pred_region
      _
    $region13: #{tpu_custom_call.1} parent=1 // pred_fallthru
      _
    // Predicated region
    $region14: #{tpu_custom_call.1} parent=1 // pred_check
      _
    $region15: #{tpu_custom_call.1} parent=1 // pred_check_branch
      %36 = sbr.rel (0) target = $region17
    $region16: #{tpu_custom_call.1} parent=1 // pred_region
      %37 = dma.done [#allocation3], 128
    $region17: #{tpu_custom_call.1} parent=1 // pred_fallthru
      _
    // Predicated region
    $region18: #{tpu_custom_call.1} parent=1 // pred_check
      _
    $region19: #{tpu_custom_call.1} parent=1 // pred_check_branch
      %39 = sbr.rel (0) target = $region21
    $region20: #{tpu_custom_call.1} parent=1 // pred_region
      %40 = dma.done [#allocation6], 1024
    $region21: #{tpu_custom_call.1} parent=1 // pred_fallthru
      _
    %v42 = vld [vmem:[#allocation2] sm:$0xff]
    %v43 = vld [vmem:[#allocation5] sm:$0xf]
    %v44 = vld [vmem:[#allocation5 + $0x4] sm:$0xf]
    %v45 = vld [vmem:[#allocation5 + $0x8] sm:$0xf]
    %v46 = vld [vmem:[#allocation5 + $0xc] sm:$0xf]
    %v47 = vld [vmem:[#allocation5 + $0x10] sm:$0xf]
    %v48 = vld [vmem:[#allocation5 + $0x14] sm:$0xf]
    %v49 = vld [vmem:[#allocation5 + $0x18] sm:$0xf]
    %v50 = vld [vmem:[#allocation5 + $0x1c] sm:$0xf]
    %v51 = vld [vmem:[#allocation5 + $0x20] sm:$0xf]
    %v52 = vld [vmem:[#allocation5 + $0x24] sm:$0xf]
    %v53 = vld [vmem:[#allocation5 + $0x28] sm:$0xf]
    %v54 = vld [vmem:[#allocation5 + $0x2c] sm:$0xf]
    %v55 = vld [vmem:[#allocation5 + $0x30] sm:$0xf]
    %v56 = vld [vmem:[#allocation5 + $0x34] sm:$0xf]
    %v57 = vld [vmem:[#allocation5 + $0x38] sm:$0xf]
    %v58 = vld [vmem:[#allocation5 + $0x3c] sm:$0xf]
    %v59 = vld [vmem:[%s2] sm:$0x1]
    %v61 = vlaneseq
    %v62 = vshrl.u32 %v61, 7
    %v63 = vsub.s32 0, %v62
    %v64 = vrot.slane %v59, %v63
    %v82 = vunpack.c.l.b16 %v43
    %v83 = vunpack.c.l.b16 %v44
    %v84 = vunpack.c.l.b16 %v45
    %v85 = vunpack.c.l.b16 %v46
    %v86 = vunpack.c.l.b16 %v47
    %v87 = vunpack.c.l.b16 %v48
    %v88 = vunpack.c.l.b16 %v49
    %v89 = vunpack.c.l.b16 %v50
    %v90 = vunpack.c.l.b16 %v51
    %v91 = vunpack.c.l.b16 %v52
    %v92 = vunpack.c.l.b16 %v53
    %v93 = vunpack.c.l.b16 %v54
    %v94 = vunpack.c.l.b16 %v55
    %v95 = vunpack.c.l.b16 %v56
    %v96 = vunpack.c.l.b16 %v57
    %v97 = vunpack.c.l.b16 %v58
    %v98 = vpack.c.b16 %v83, %v82
    %v99 = vpack.c.b16 %v85, %v84
    %v100 = vpack.c.b16 %v87, %v86
    %v101 = vpack.c.b16 %v89, %v88
    %v102 = vpack.c.b16 %v91, %v90
    %v103 = vpack.c.b16 %v93, %v92
    %v104 = vpack.c.b16 %v95, %v94
    %v105 = vpack.c.b16 %v97, %v96
    %114 = vmatprep.subr.bf16.mxu0 0
    %115 = vmatpush1.bf16.msra.mxu0 %v98
    %116 = vmatprep.subr.bf16.mxu0 0
    %117 = vmatpush1.bf16.msra.mxu0 %v99
    %118 = vmatprep.subr.bf16.mxu0 0
    %119 = vmatpush1.bf16.msra.mxu0 %v100
    %120 = vmatprep.subr.bf16.mxu0 0
    %121 = vmatpush1.bf16.msra.mxu0 %v101
    %122 = vmatprep.subr.bf16.mxu0 0
    %123 = vmatpush1.bf16.msra.mxu0 %v102
    %124 = vmatprep.subr.bf16.mxu0 0
    %125 = vmatpush1.bf16.msra.mxu0 %v103
    %126 = vmatprep.subr.bf16.mxu0 0
    %127 = vmatpush1.bf16.msra.mxu0 %v104
    %128 = vmatprep.subr.bf16.mxu0 0
    %129 = vmatpush1.bf16.msra.mxu0 %v105
    %130 = vmatprep.subr.bf16.mxu0 0
    %131 = vmatpush1.bf16.msra.mxu0 0
    %132 = vmatprep.subr.bf16.mxu0 0
    %133 = vmatpush1.bf16.msra.mxu0 0
    %134 = vmatprep.subr.bf16.mxu0 0
    %135 = vmatpush1.bf16.msra.mxu0 0
    %136 = vmatprep.subr.bf16.mxu0 0
    %137 = vmatpush1.bf16.msra.mxu0 0
    %138 = vmatprep.subr.bf16.mxu0 0
    %139 = vmatpush1.bf16.msra.mxu0 0
    %140 = vmatprep.subr.bf16.mxu0 0
    %141 = vmatpush1.bf16.msra.mxu0 0
    %142 = vmatprep.subr.bf16.mxu0 0
    %143 = vmatpush1.bf16.msra.mxu0 0
    %144 = vmatprep.subr.bf16.mxu0 0
    %145 = vmatpush1.bf16.msra.mxu0 0
    %146 = vmatprep.mubr.f32.mxu0 0.0
    %147 = vmatmul.mubr.f32.gmra.mrb[0].mxu0 %v42
    %v148 = vpop.f32.mrb[0].mxu0
    %v149 = vadd.f32 %v64, %v148
    %v150 = vpop.f32.mrb[0].mxu0
    %151 = vdwg.mxu0
    %152 = vst [vmem:[#allocation7] sm:$0xff] %v149
    // Predicated region
    $region22: #{tpu_custom_call.1} parent=1 // pred_check
      _
    $region23: #{tpu_custom_call.1} parent=1 // pred_check_branch
      %154 = sbr.rel (0) target = $region25
    $region24: #{tpu_custom_call.1} parent=1 // pred_region
      %s156 = ssub.s32 128, 128
      %157 = vsyncadd [#allocation4], %s156
      %s159 = sshll.u32 [#allocation7], 4
      %s160 = int_to_ptr.vmem [resolvable:$true] %s159
      %162 = dma.vmem_to_hbm [thread:$0]  %s160, 128, %s3, [#allocation4]
    $region25: #{tpu_custom_call.1} parent=1 // pred_fallthru
      _
    // Predicated region
    $region26: #{tpu_custom_call.1} parent=1 // pred_check
      _
    $region27: #{tpu_custom_call.1} parent=1 // pred_check_branch
      %164 = sbr.rel (0) target = $region29
    $region28: #{tpu_custom_call.1} parent=1 // pred_region
      %165 = dma.done [#allocation4], 128
    $region29: #{tpu_custom_call.1} parent=1 // pred_fallthru
      _
    %166 = vsyncpa [#allocation3], 1
    %167 = vsyncpa [#allocation6], 1
    %168 = vsyncpa [#allocation4], 1

</llo_original>
